<compile_context>
chip_gen: v7x
topology: tpu7x:2x2x1
jax: 0.10.0
libtpu: 0.0.40
codegen_flags: <defaults>
</compile_context>

<pallas_src>
import jax
import jax.numpy as jnp
from jax.experimental import pallas as pl
from jax.experimental.pallas import tpu as pltpu


# ----------------------------------------------------------------------------
# Pallas kernel: fused 2-layer KasminaLayer MLP (default transforms + blend)
# ----------------------------------------------------------------------------
def _morphable_mlp_kernel(alphas_ref, x_ref, w1_ref, b1_ref, w2_ref, b2_ref, o_ref):
    # alphas_ref: SMEM [2]            - per-layer seed blend factors
    # x_ref:      VMEM [TILE_B, IN]
    # w1_ref:     VMEM [IN, HID]      (pre-transposed vs. PyTorch's [HID, IN])
    # b1_ref:     VMEM [1, HID]
    # w2_ref:     VMEM [HID, OUT]     (pre-transposed)
    # b2_ref:     VMEM [1, OUT]
    # o_ref:      VMEM [TILE_B, OUT]
    x = x_ref[...]

    # ---- Layer 1: KasminaLinear(IN -> HID) default transform + ReLU --------
    h = jnp.dot(x, w1_ref[...], preferred_element_type=jnp.float32) + b1_ref[...]
    h = jnp.maximum(h, 0.0)
    # Morphogenetic blend: (1 - alpha) * default + alpha * seed_kernel(x).
    # All seeds are dormant (no kernel artifact loaded) so the seed term is
    # identically zero; the dead zero tile / multiply-add is elided and only
    # the (1 - alpha) scale remains.
    # TODO(synk): dynamically-loaded seed-kernel execution (load_kernel) has no
    # static Pallas equivalent; only the dormant (default) path is implemented.
    h = (1.0 - alphas_ref[0]) * h

    # ---- Layer 2: KasminaLinear(HID -> OUT) default transform --------------
    y = jnp.dot(h, w2_ref[...], preferred_element_type=jnp.float32) + b2_ref[...]
    y = (1.0 - alphas_ref[1]) * y

    o_ref[...] = y.astype(o_ref.dtype)


def morphable_forward(x, params, alphas, *, tile_b=128):
    """Fused forward of the wrapped model (both KasminaLinear layers in one call)."""
    batch, in_f = x.shape
    w1, b1 = params["w1"], params["b1"]
    w2, b2 = params["w2"], params["b2"]
    hid_f = w1.shape[1]
    out_f = w2.shape[1]
    assert w1.shape[0] == in_f and w2.shape[0] == hid_f
    assert batch % tile_b == 0, "batch must be a multiple of the batch tile"

    grid = (batch // tile_b,)

    return pl.pallas_call(
        _morphable_mlp_kernel,
        out_shape=jax.ShapeDtypeStruct((batch, out_f), jnp.float32),
        grid=grid,
        in_specs=[
            pl.BlockSpec(memory_space=pltpu.MemorySpace.SMEM),      # alphas [2]
            pl.BlockSpec((tile_b, in_f), lambda i: (i, 0)),         # x tile
            pl.BlockSpec((in_f, hid_f), lambda i: (0, 0)),          # W1
            pl.BlockSpec((1, hid_f), lambda i: (0, 0)),             # b1
            pl.BlockSpec((hid_f, out_f), lambda i: (0, 0)),         # W2
            pl.BlockSpec((1, out_f), lambda i: (0, 0)),             # b2
        ],
        out_specs=pl.BlockSpec((tile_b, out_f), lambda i: (i, 0)),
        compiler_params=pltpu.CompilerParams(
            # Batch tiles are independent -> shard grid steps across v7x's two
            # TensorCores; harmless on single-TC v5e/v6e.
            dimension_semantics=("parallel",),
            # Tiny tiles (~0.5 MiB with double-buffering); explicit limit with
            # plenty of headroom on every generation (v7x physical = 64 MiB).
            vmem_limit_bytes=32 * 1024 * 1024,
        ),
    )(alphas, x, w1, b1, w2, b2)


# ----------------------------------------------------------------------------
# MorphableModel wrapper (pure-Python glue around the fused Pallas kernel)
# ----------------------------------------------------------------------------
class MorphableModelPallas:
    """Morphable model: wrapped 2-layer MLP whose Linears are KasminaLayers."""

    def __init__(self, params, alphas):
        self.params = params
        self.alphas = alphas                 # per-layer seed blend factors
        self.total_forward_calls = 0
        self.morphogenetic_active = False    # no kernels loaded

    def set_seed_alpha(self, layer_idx, alpha):
        self.alphas = self.alphas.at[layer_idx].set(jnp.float32(alpha))

    def __call__(self, x):
        self.total_forward_calls += 1
        return morphable_forward(x, self.params, self.alphas)


def make_params(key, in_f, hid_f, out_f):
    k1, k2, k3, k4 = jax.random.split(key, 4)
    # Deterministic synthetic init (Kaiming-ish scaling), stored as [in, out].
    w1 = jax.random.normal(k1, (in_f, hid_f), jnp.float32) * (1.0 / jnp.sqrt(in_f))
    b1 = jax.random.normal(k2, (1, hid_f), jnp.float32) * 0.5
    w2 = jax.random.normal(k3, (hid_f, out_f), jnp.float32) * (1.0 / jnp.sqrt(hid_f))
    b2 = jax.random.normal(k4, (1, out_f), jnp.float32) * 0.5
    return {"w1": w1, "b1": b1, "w2": w2, "b2": b2}


def reference_forward(x, p, alphas):
    """Pure-JAX reference of the wrapped model (dormant seeds -> default path)."""
    h = jnp.maximum(x @ p["w1"] + p["b1"], 0.0)
    h = (1.0 - alphas[0]) * h
    y = h @ p["w2"] + p["b2"]
    return (1.0 - alphas[1]) * y


if __name__ == "__main__":
    # Lane-dense feature dims (multiples of 128) and a sublane-dense batch tile
    # (128) keep vector stores unmasked and give the MXU full-width tiles while
    # staying small (weights are 64 KiB each).
    BATCH, IN_F, HID_F, OUT_F = 256, 128, 128, 128
    TILE_B = 128

    key = jax.random.PRNGKey(0)
    k_x, k_p = jax.random.split(key)
    x = jax.random.normal(k_x, (BATCH, IN_F), jnp.float32)
    params = make_params(k_p, IN_F, HID_F, OUT_F)
    alphas = jnp.zeros((2,), jnp.float32)  # all seeds dormant

    model = MorphableModelPallas(params, alphas)
    out = model(x)
    out = jax.block_until_ready(out)

    ref = reference_forward(x, params, alphas)
    assert out.shape == (BATCH, OUT_F)
    assert jnp.allclose(out, ref, atol=2e-2, rtol=2e-2), "Pallas output mismatch"

    print("KERNEL_OK")
</pallas_src>

<mosaic_0001>
module attributes {stable_mosaic.version = 11 : i64} {
  func.func @_morphable_mlp_kernel(%arg0: i32, %arg1: memref<2xf32, #tpu.memory_space<smem>>, %arg2: memref<128x128xf32, #tpu.memory_space<vmem>>, %arg3: memref<128x128xf32, #tpu.memory_space<vmem>>, %arg4: memref<1x128xf32, #tpu.memory_space<vmem>>, %arg5: memref<128x128xf32, #tpu.memory_space<vmem>>, %arg6: memref<1x128xf32, #tpu.memory_space<vmem>>, %arg7: memref<128x128xf32, #tpu.memory_space<vmem>>) attributes {dimension_semantics = [#tpu.dimension_semantics<parallel>], iteration_bounds = array<i64: 2>, scalar_prefetch = 0 : i64, scratch_operands = 0 : i64, tpu.core_type = #tpu.core_type<tc>, window_params = [{transform_indices = @transform_0, window_bounds = array<i64: 2>}, {transform_indices = @transform_1, window_bounds = array<i64: 128, 128>}, {pipeline_mode = #tpu.pipeline_mode<synchronous>, transform_indices = @transform_2, window_bounds = array<i64: 128, 128>}, {pipeline_mode = #tpu.pipeline_mode<synchronous>, transform_indices = @transform_3, window_bounds = array<i64: 1, 128>}, {pipeline_mode = #tpu.pipeline_mode<synchronous>, transform_indices = @transform_4, window_bounds = array<i64: 128, 128>}, {pipeline_mode = #tpu.pipeline_mode<synchronous>, transform_indices = @transform_5, window_bounds = array<i64: 1, 128>}, {transform_indices = @transform_6, window_bounds = array<i64: 128, 128>}]} {
    %c0 = arith.constant 0 : index
    %c0_0 = arith.constant 0 : index
    %0 = vector.load %arg2[%c0, %c0_0] : memref<128x128xf32, #tpu.memory_space<vmem>>, vector<128x128xf32>
    %c0_1 = arith.constant 0 : index
    %c0_2 = arith.constant 0 : index
    %1 = vector.load %arg3[%c0_1, %c0_2] : memref<128x128xf32, #tpu.memory_space<vmem>>, vector<128x128xf32>
    %cst = arith.constant dense<0.000000e+00> : vector<128x128xf32>
    %2 = tpu.matmul %0, %1, %cst {dimension_numbers = #tpu.dot_dimension_numbers<[1], [0], [0], [1], [0, 0, 1, 1], [], []>} : vector<128x128xf32>, vector<128x128xf32>, vector<128x128xf32> -> vector<128x128xf32>
    %c0_3 = arith.constant 0 : index
    %c0_4 = arith.constant 0 : index
    %3 = vector.load %arg4[%c0_3, %c0_4] : memref<1x128xf32, #tpu.memory_space<vmem>>, vector<1x128xf32>
    %4 = vector.broadcast %3 : vector<1x128xf32> to vector<128x128xf32>
    %5 = arith.addf %2, %4 : vector<128x128xf32>
    %cst_5 = arith.constant 0.000000e+00 : f32
    %6 = vector.broadcast %cst_5 : f32 to vector<128x128xf32>
    %7 = arith.maximumf %5, %6 : vector<128x128xf32>
    %c0_6 = arith.constant 0 : index
    %8 = memref.load %arg1[%c0_6] : memref<2xf32, #tpu.memory_space<smem>>
    %cst_7 = arith.constant 1.000000e+00 : f32
    %9 = arith.subf %cst_7, %8 : f32
    %10 = vector.broadcast %9 : f32 to vector<128x128xf32>
    %11 = arith.mulf %10, %7 : vector<128x128xf32>
    %c0_8 = arith.constant 0 : index
    %c0_9 = arith.constant 0 : index
    %12 = vector.load %arg5[%c0_8, %c0_9] : memref<128x128xf32, #tpu.memory_space<vmem>>, vector<128x128xf32>
    %cst_10 = arith.constant dense<0.000000e+00> : vector<128x128xf32>
    %13 = tpu.matmul %11, %12, %cst_10 {dimension_numbers = #tpu.dot_dimension_numbers<[1], [0], [0], [1], [0, 0, 1, 1], [], []>} : vector<128x128xf32>, vector<128x128xf32>, vector<128x128xf32> -> vector<128x128xf32>
    %c0_11 = arith.constant 0 : index
    %c0_12 = arith.constant 0 : index
    %14 = vector.load %arg6[%c0_11, %c0_12] : memref<1x128xf32, #tpu.memory_space<vmem>>, vector<1x128xf32>
    %15 = vector.broadcast %14 : vector<1x128xf32> to vector<128x128xf32>
    %16 = arith.addf %13, %15 : vector<128x128xf32>
    %c1 = arith.constant 1 : index
    %17 = memref.load %arg1[%c1] : memref<2xf32, #tpu.memory_space<smem>>
    %cst_13 = arith.constant 1.000000e+00 : f32
    %18 = arith.subf %cst_13, %17 : f32
    %19 = vector.broadcast %18 : f32 to vector<128x128xf32>
    %20 = arith.mulf %19, %16 : vector<128x128xf32>
    %c0_14 = arith.constant 0 : index
    %c0_15 = arith.constant 0 : index
    %21 = vector.load %arg7[%c0_14, %c0_15] : memref<128x128xf32, #tpu.memory_space<vmem>>, vector<128x128xf32>
    tpu.vector_store %arg7[%c0_14, %c0_15], %20 {strides = array<i32>} : memref<128x128xf32, #tpu.memory_space<vmem>>, vector<128x128xf32>,
    return
  }
  func.func @transform_0(%arg0: i32) -> i32 {
    %c0_i32 = arith.constant 0 : i32
    %c0_i32_0 = arith.constant 0 : i32
    return %c0_i32 : i32
  }
  func.func @transform_1(%arg0: i32) -> (i32, i32) {
    %c0_i32 = arith.constant 0 : i32
    %c0_i32_0 = arith.constant 0 : i32
    return %arg0, %c0_i32 : i32, i32
  }
  func.func @transform_2(%arg0: i32) -> (i32, i32) {
    %c0_i32 = arith.constant 0 : i32
    %c0_i32_0 = arith.constant 0 : i32
    %c0_i32_1 = arith.constant 0 : i32
    return %c0_i32, %c0_i32_0 : i32, i32
  }
  func.func @transform_3(%arg0: i32) -> (i32, i32) {
    %c0_i32 = arith.constant 0 : i32
    %c0_i32_0 = arith.constant 0 : i32
    %c0_i32_1 = arith.constant 0 : i32
    return %c0_i32, %c0_i32_0 : i32, i32
  }
  func.func @transform_4(%arg0: i32) -> (i32, i32) {
    %c0_i32 = arith.constant 0 : i32
    %c0_i32_0 = arith.constant 0 : i32
    %c0_i32_1 = arith.constant 0 : i32
    return %c0_i32, %c0_i32_0 : i32, i32
  }
  func.func @transform_5(%arg0: i32) -> (i32, i32) {
    %c0_i32 = arith.constant 0 : i32
    %c0_i32_0 = arith.constant 0 : i32
    %c0_i32_1 = arith.constant 0 : i32
    return %c0_i32, %c0_i32_0 : i32, i32
  }
  func.func @transform_6(%arg0: i32) -> (i32, i32) {
    %c0_i32 = arith.constant 0 : i32
    %c0_i32_0 = arith.constant 0 : i32
    return %arg0, %c0_i32 : i32, i32
  }
}

</mosaic_0001>

<llo_original>
// kernel: tpu_custom_call.1
$region0: #{tpu_custom_call.1}
  #allocation0 [shape = 'u32[]', space=smem, size = 0x4, offset = 0x4, fixed_abs, tag = 'smem constant byte address 0x4 - core index']
  #allocation1 [shape = 'u32[144,128]{1,0:T(1,128)}', space=vmem, size = 0x12000, scoped, tag = 'internal scratch']
  %s0 = inlined_call_operand.hbm [shape: f32[2], index: 0, kind: input, shape index: {}]
  %s1 = inlined_call_operand.hbm [shape: f32[256,128], index: 1, kind: input, shape index: {}]
  %s2 = inlined_call_operand.hbm [shape: f32[128,128], index: 2, kind: input, shape index: {}]
  %s3 = inlined_call_operand.vmem [shape: f32[1,128], index: 3, kind: input, shape index: {}]
  %s4 = inlined_call_operand.hbm [shape: f32[128,128], index: 4, kind: input, shape index: {}]
  %s5 = inlined_call_operand.vmem [shape: f32[1,128], index: 5, kind: input, shape index: {}]
  %s6 = inlined_call_operand.hbm [shape: f32[256,128], index: 6, kind: output, shape index: {}]
  %s7 = sld [smem:[#allocation0]]
  $region73: #{tpu_custom_call.1} parent=0
    _
  %s9 = ssub.s32 1, %s7
  %s10 = scalar_select 0, %s9, %s7
  $region1: #{tpu_custom_call.1} parent=0
    #allocation2 [shape = 'u8[512]{0}', space=smem, size = 0x200, scoped, tag = 'input window, operand 0, single buffered']
    #allocation3 [shape = 's32[2]{0}', space=sflag, size = 0x8, scoped, tag = 'scoped memory for tpu_custom_call.1']
    #allocation4 [shape = 's32[2]{0}', space=sflag, size = 0x8, scoped, tag = 'scoped memory for tpu_custom_call.1']
    #allocation5 [shape = 's32[2]{0}', space=sflag, size = 0x8, scoped, tag = 'scoped memory for tpu_custom_call.1']
    #allocation6 [shape = 'u8[131072]{0}', space=vmem, size = 0x20000, scoped, tag = 'input window, operand 1']
    #allocation7 [shape = 'u8[65536]{0}', space=vmem, size = 0x10000, scoped, tag = 'input window, operand 2, single buffered']
    #allocation8 [shape = 's32[1]{0}', space=sflag, size = 0x4, scoped, tag = 'scoped memory for tpu_custom_call.1']
    #allocation9 [shape = 'u8[65536]{0}', space=vmem, size = 0x10000, scoped, tag = 'input window, operand 4, single buffered']
    #allocation10 [shape = 'u8[131072]{0}', space=vmem, size = 0x20000, scoped, tag = 'output window, operand 0']
    %11 = vsyncpa [#allocation5], 0
    %12 = vsyncpa [#allocation3], 0
    %s13 = scalar_lea.sflag [#allocation3], 1
    %14 = vsyncpa %s13, 0
    %15 = vsyncpa [#allocation8], 0
    %16 = vsyncpa [#allocation4], 0
    %s17 = scalar_lea.sflag [#allocation4], 1
    %18 = vsyncpa %s17, 0
    loop: start=0, step=1, limit=4
    $region2: #{tpu_custom_call.1} parent=1 // loop_pre_header
      _
    $region3: #{tpu_custom_call.1} parent=1 // loop_header
      %s20 = sphi 0, %s24
      %p21 = scmp.ge.s32.totalorder %s20, 4
      %s28 = sphi 0, %s28
      %s30 = sphi 0, %s28
      %s31 = sphi 0, %s30
      %s45 = sphi 0, %s31
      %s51 = sphi 0, %s53
      %s54 = sphi 0, %s51
      %s55 = sphi 0, %s54
      %s71 = sphi 0, %s55
      %s75 = sphi 0, %s75
      %s77 = sphi 0, %s75
      %s78 = sphi 0, %s77
      %s92 = sphi 0, %s78
      %s96 = sphi 0, %s96
      %s98 = sphi 0, %s96
      %s99 = sphi 0, %s98
      %s113 = sphi 0, %s99
      %s117 = sphi 0, %s117
      %s119 = sphi 0, %s117
      %s120 = sphi 0, %s119
      %s134 = sphi 0, %s120
      %s138 = sphi 0, %s138
      %s140 = sphi 0, %s138
      %s141 = sphi 0, %s140
      %s155 = sphi 0, %s141
      %s161 = sphi 0, %s163
      %s164 = sphi 0, %s161
      %s165 = sphi 0, %s164
      %s181 = sphi 0, %s165
    $region4: #{tpu_custom_call.1} parent=1 // loop_header_branch
      %23 = sbr.rel (%p21) target = $region8
    $region5: #{tpu_custom_call.1} parent=1 // loop_body
      %s25 = ssub.s32 %s20, 1
      %s26 = ssub.s32 %s20, 2
      %s27 = sadd.s32 %s20, 1
      %s29 = sadd.s32 %s28, 1
      %p32 = scmp.eq.s32.totalorder %s20, 1
      %p33 = scmp.ne.s32.totalorder %s28, %s30
      %p34 = scmp.eq.s32.totalorder %s20, 0
      %p35 = por %p33, %p34
      %p36 = scmp.ne.s32.totalorder %s28, %s30
      %p37 = scmp.eq.s32.totalorder %s25, 1
      %p38 = por %p36, %p37
      %p39 = scmp.ne.s32.totalorder %s30, %s31
      %p40 = scmp.eq.s32.totalorder %s25, 0
      %p41 = por %p39, %p40
      %p42 = scmp.ne.s32.totalorder %s30, %s31
      %p43 = scmp.eq.s32.totalorder %s26, 1
      %p44 = por %p42, %p43
      %p46 = scmp.ne.s32.totalorder %s31, %s45
      %p47 = scmp.eq.s32.totalorder %s26, 0
      %p48 = por %p46, %p47
      %s49 = ssub.s32 %s20, %s27
      %p50 = scmp.eq.s32.totalorder %s49, 0
      %s52 = sadd.s32 %s51, 1
      %s53 = scalar_select %p50, %s51, %s52
      %p56 = pneg %p50
      %p57 = scmp.eq.s32.totalorder %s20, 1
      %p58 = por %p56, %p57
      %p59 = scmp.ne.s32.totalorder %s51, %s54
      %p60 = scmp.eq.s32.totalorder %s20, 0
      %p61 = por %p59, %p60
      %p62 = scmp.ne.s32.totalorder %s51, %s54
      %p63 = scmp.eq.s32.totalorder %s25, 1
      %p64 = por %p62, %p63
      %p65 = scmp.ne.s32.totalorder %s54, %s55
      %p66 = scmp.eq.s32.totalorder %s25, 0
      %p67 = por %p65, %p66
      %p68 = scmp.ne.s32.totalorder %s54, %s55
      %p69 = scmp.eq.s32.totalorder %s26, 1
      %p70 = por %p68, %p69
      %p72 = scmp.ne.s32.totalorder %s55, %s71
      %p73 = scmp.eq.s32.totalorder %s26, 0
      %p74 = por %p72, %p73
      %s76 = sadd.s32 %s75, 1
      %p79 = scmp.eq.s32.totalorder %s20, 1
      %p80 = scmp.ne.s32.totalorder %s75, %s77
      %p81 = scmp.eq.s32.totalorder %s20, 0
      %p82 = por %p80, %p81
      %p83 = scmp.ne.s32.totalorder %s75, %s77
      %p84 = scmp.eq.s32.totalorder %s25, 1
      %p85 = por %p83, %p84
      %p86 = scmp.ne.s32.totalorder %s77, %s78
      %p87 = scmp.eq.s32.totalorder %s25, 0
      %p88 = por %p86, %p87
      %p89 = scmp.ne.s32.totalorder %s77, %s78
      %p90 = scmp.eq.s32.totalorder %s26, 1
      %p91 = por %p89, %p90
      %p93 = scmp.ne.s32.totalorder %s78, %s92
      %p94 = scmp.eq.s32.totalorder %s26, 0
      %p95 = por %p93, %p94
      %s97 = sadd.s32 %s96, 1
      %p100 = scmp.eq.s32.totalorder %s20, 1
      %p101 = scmp.ne.s32.totalorder %s96, %s98
      %p102 = scmp.eq.s32.totalorder %s20, 0
      %p103 = por %p101, %p102
      %p104 = scmp.ne.s32.totalorder %s96, %s98
      %p105 = scmp.eq.s32.totalorder %s25, 1
      %p106 = por %p104, %p105
      %p107 = scmp.ne.s32.totalorder %s98, %s99
      %p108 = scmp.eq.s32.totalorder %s25, 0
      %p109 = por %p107, %p108
      %p110 = scmp.ne.s32.totalorder %s98, %s99
      %p111 = scmp.eq.s32.totalorder %s26, 1
      %p112 = por %p110, %p111
      %p114 = scmp.ne.s32.totalorder %s99, %s113
      %p115 = scmp.eq.s32.totalorder %s26, 0
      %p116 = por %p114, %p115
      %s118 = sadd.s32 %s117, 1
      %p121 = scmp.eq.s32.totalorder %s20, 1
      %p122 = scmp.ne.s32.totalorder %s117, %s119
      %p123 = scmp.eq.s32.totalorder %s20, 0
      %p124 = por %p122, %p123
      %p125 = scmp.ne.s32.totalorder %s117, %s119
      %p126 = scmp.eq.s32.totalorder %s25, 1
      %p127 = por %p125, %p126
      %p128 = scmp.ne.s32.totalorder %s119, %s120
      %p129 = scmp.eq.s32.totalorder %s25, 0
      %p130 = por %p128, %p129
      %p131 = scmp.ne.s32.totalorder %s119, %s120
      %p132 = scmp.eq.s32.totalorder %s26, 1
      %p133 = por %p131, %p132
      %p135 = scmp.ne.s32.totalorder %s120, %s134
      %p136 = scmp.eq.s32.totalorder %s26, 0
      %p137 = por %p135, %p136
      %s139 = sadd.s32 %s138, 1
      %p142 = scmp.eq.s32.totalorder %s20, 1
      %p143 = scmp.ne.s32.totalorder %s138, %s140
      %p144 = scmp.eq.s32.totalorder %s20, 0
      %p145 = por %p143, %p144
      %p146 = scmp.ne.s32.totalorder %s138, %s140
      %p147 = scmp.eq.s32.totalorder %s25, 1
      %p148 = por %p146, %p147
      %p149 = scmp.ne.s32.totalorder %s140, %s141
      %p150 = scmp.eq.s32.totalorder %s25, 0
      %p151 = por %p149, %p150
      %p152 = scmp.ne.s32.totalorder %s140, %s141
      %p153 = scmp.eq.s32.totalorder %s26, 1
      %p154 = por %p152, %p153
      %p156 = scmp.ne.s32.totalorder %s141, %s155
      %p157 = scmp.eq.s32.totalorder %s26, 0
      %p158 = por %p156, %p157
      %s159 = ssub.s32 %s20, %s27
      %p160 = scmp.eq.s32.totalorder %s159, 0
      %s162 = sadd.s32 %s161, 1
      %s163 = scalar_select %p160, %s161, %s162
      %p166 = pneg %p160
      %p167 = scmp.eq.s32.totalorder %s20, 1
      %p168 = por %p166, %p167
      %p169 = scmp.ne.s32.totalorder %s161, %s164
      %p170 = scmp.eq.s32.totalorder %s20, 0
      %p171 = por %p169, %p170
      %p172 = scmp.ne.s32.totalorder %s161, %s164
      %p173 = scmp.eq.s32.totalorder %s25, 1
      %p174 = por %p172, %p173
      %p175 = scmp.ne.s32.totalorder %s164, %s165
      %p176 = scmp.eq.s32.totalorder %s25, 0
      %p177 = por %p175, %p176
      %p178 = scmp.ne.s32.totalorder %s164, %s165
      %p179 = scmp.eq.s32.totalorder %s26, 1
      %p180 = por %p178, %p179
      %p182 = scmp.ne.s32.totalorder %s165, %s181
      %p183 = scmp.eq.s32.totalorder %s26, 0
      %p184 = por %p182, %p183
      %p185 = scmp.le.s32.totalorder 1, %s20
      %p186 = scmp.lt.s32.totalorder %s20, 3
      %p187 = pnand %p185, %p186
      %p188 = pneg %p187
      // Predicated region
      $region9: #{tpu_custom_call.1} parent=5 // pred_check
        _
      $region10: #{tpu_custom_call.1} parent=5 // pred_check_branch
        %190 = sbr.rel (%p187) target = $region12
      $region11: #{tpu_custom_call.1} parent=5 // pred_region
        %s191 = ssub.s32 %s20, 1
        // Predicated region
        $region13: #{tpu_custom_call.1} parent=11 // pred_check
          %p192 = pneg %p41
        $region14: #{tpu_custom_call.1} parent=11 // pred_check_branch
          %194 = sbr.rel (%p192) target = $region16
        $region15: #{tpu_custom_call.1} parent=11 // pred_region
          %s196 = ssub.s32 16, 16
          %197 = vsyncadd [#allocation5], %s196
          %200 = dma.hbm_to_smem %s0, 16, [#allocation2], [#allocation5]
        $region16: #{tpu_custom_call.1} parent=11 // pred_fallthru
          _
        // Predicated region
        $region17: #{tpu_custom_call.1} parent=11 // pred_check
          %p201 = pneg %p88
        $region18: #{tpu_custom_call.1} parent=11 // pred_check_branch
          %203 = sbr.rel (%p201) target = $region20
        $region19: #{tpu_custom_call.1} parent=11 // pred_region
          %s205 = ssub.s32 2048, 2048
          %206 = vsyncadd [#allocation8], %s205
          %s207 = sshll.u32 [#allocation7], 4
          %s208 = int_to_ptr.vmem [resolvable:$true] %s207
          %213 = dma.hbm_to_vmem [thread:$0]  %s2, 2048, %s208, [#allocation8], 128, 128, 8
        $region20: #{tpu_custom_call.1} parent=11 // pred_fallthru
          _
        // Predicated region
        $region21: #{tpu_custom_call.1} parent=11 // pred_check
          %p214 = pneg %p109
        $region22: #{tpu_custom_call.1} parent=11 // pred_check_branch
          %216 = sbr.rel (%p214) target = $region24
        $region23: #{tpu_custom_call.1} parent=11 // pred_region
          _
        $region24: #{tpu_custom_call.1} parent=11 // pred_fallthru
          _
        // Predicated region
        $region25: #{tpu_custom_call.1} parent=11 // pred_check
          %p217 = pneg %p130
        $region26: #{tpu_custom_call.1} parent=11 // pred_check_branch
          %219 = sbr.rel (%p217) target = $region28
        $region27: #{tpu_custom_call.1} parent=11 // pred_region
          %s221 = ssub.s32 2048, 2048
          %222 = vsyncadd [#allocation8], %s221
          %s223 = sshll.u32 [#allocation9], 4
          %s224 = int_to_ptr.vmem [resolvable:$true] %s223
          %229 = dma.hbm_to_vmem [thread:$0]  %s4, 2048, %s224, [#allocation8], 128, 128, 8
        $region28: #{tpu_custom_call.1} parent=11 // pred_fallthru
          _
        // Predicated region
        $region29: #{tpu_custom_call.1} parent=11 // pred_check
          %p230 = pneg %p151
        $region30: #{tpu_custom_call.1} parent=11 // pred_check_branch
          %232 = sbr.rel (%p230) target = $region32
        $region31: #{tpu_custom_call.1} parent=11 // pred_region
          _
        $region32: #{tpu_custom_call.1} parent=11 // pred_fallthru
          _
      $region12: #{tpu_custom_call.1} parent=5 // pred_fallthru
        _
      %p233 = scmp.lt.s32.totalorder %s20, 2
      // Predicated region
      $region33: #{tpu_custom_call.1} parent=5 // pred_check
        %p234 = pneg %p233
      $region34: #{tpu_custom_call.1} parent=5 // pred_check_branch
        %236 = sbr.rel (%p234) target = $region36
      $region35: #{tpu_custom_call.1} parent=5 // pred_region
        // Predicated region
        $region37: #{tpu_custom_call.1} parent=35 // pred_check
          %p237 = pneg %p61
        $region38: #{tpu_custom_call.1} parent=35 // pred_check_branch
          %239 = sbr.rel (%p237) target = $region40
        $region39: #{tpu_custom_call.1} parent=35 // pred_region
          %s240 = sand.u32 %s51, 1
          %s241 = scalar_lea.sflag [#allocation3], %s240
          %s242 = sand.u32 %s51, 1
          %s243 = smul.addr %s242, 128
          %s244 = scalar_lea.vmem [#allocation6], %s243
          %s245 = smul.u32 16, %s20
          %s247 = ssub.s32 2048, 2048
          %248 = vsyncadd %s241, %s247
          %s249 = smul.addr %s245, 128
          %s250 = scalar_lea.hbm %s1, %s249
          %s251 = sshll.u32 %s244, 4
          %s252 = int_to_ptr.vmem [resolvable:$true] %s251
          %257 = dma.hbm_to_vmem [thread:$0]  %s250, 2048, %s252, %s241, 128, 128, 8
        $region40: #{tpu_custom_call.1} parent=35 // pred_fallthru
          _
      $region36: #{tpu_custom_call.1} parent=5 // pred_fallthru
        _
      %p258 = scmp.le.s32.totalorder 1, %s20
      %p259 = scmp.lt.s32.totalorder %s20, 3
      %p260 = pnand %p258, %p259
      %p261 = pneg %p260
      // Predicated region
      $region41: #{tpu_custom_call.1} parent=5 // pred_check
        _
      $region42: #{tpu_custom_call.1} parent=5 // pred_check_branch
        %263 = sbr.rel (%p260) target = $region44
      $region43: #{tpu_custom_call.1} parent=5 // pred_region
        %s264 = ssub.s32 %s20, 1
        // Predicated region
        $region45: #{tpu_custom_call.1} parent=43 // pred_check
          %p265 = pneg %p41
        $region46: #{tpu_custom_call.1} parent=43 // pred_check_branch
          %267 = sbr.rel (%p265) target = $region48
        $region47: #{tpu_custom_call.1} parent=43 // pred_region
          %268 = dma.done [#allocation5], 16
        $region48: #{tpu_custom_call.1} parent=43 // pred_fallthru
          _
        %s269 = sand.u32 %s54, 1
        %s270 = scalar_lea.sflag [#allocation3], %s269
        %s271 = sand.u32 %s54, 1
        %s272 = smul.addr %s271, 128
        %s273 = scalar_lea.vmem [#allocation6], %s272
        // Predicated region
        $region49: #{tpu_custom_call.1} parent=43 // pred_check
          %p274 = pneg %p67
        $region50: #{tpu_custom_call.1} parent=43 // pred_check_branch
          %276 = sbr.rel (%p274) target = $region52
        $region51: #{tpu_custom_call.1} parent=43 // pred_region
          %277 = dma.done %s270, 2048
        $region52: #{tpu_custom_call.1} parent=43 // pred_fallthru
          _
        // Predicated region
        $region53: #{tpu_custom_call.1} parent=43 // pred_check
          %p278 = pneg %p88
        $region54: #{tpu_custom_call.1} parent=43 // pred_check_branch
          %280 = sbr.rel (%p278) target = $region56
        $region55: #{tpu_custom_call.1} parent=43 // pred_region
          %281 = dma.done [#allocation8], 2048
        $region56: #{tpu_custom_call.1} parent=43 // pred_fallthru
          _
        // Predicated region
        $region57: #{tpu_custom_call.1} parent=43 // pred_check
          %p282 = pneg %p130
        $region58: #{tpu_custom_call.1} parent=43 // pred_check_branch
          %284 = sbr.rel (%p282) target = $region60
        $region59: #{tpu_custom_call.1} parent=43 // pred_region
          %285 = dma.done [#allocation8], 2048
        $region60: #{tpu_custom_call.1} parent=43 // pred_fallthru
          _
        %286 = sfence
        %p287 = pneg %p41
        %p288 = pneg %p38
        %s289 = sand.u32 %s54, 1
        %s290 = scalar_lea.sflag [#allocation3], %s289
        %s291 = sand.u32 %s54, 1
        %s292 = smul.addr %s291, 128
        %s293 = scalar_lea.vmem [#allocation6], %s292
        %p294 = pneg %p67
        %p295 = pneg %p64
        %p296 = pneg %p88
        %p297 = pneg %p85
        %p298 = pneg %p109
        %p299 = pneg %p106
        %p300 = pneg %p130
        %p301 = pneg %p127
        %p302 = pneg %p151
        %p303 = pneg %p148
        %p304 = pneg %p177
        %p305 = pneg %p174
        %s306 = sand.u32 %s164, 1
        %s307 = scalar_lea.sflag [#allocation4], %s306
        %s308 = sand.u32 %s164, 1
        %s309 = smul.addr %s308, 128
        %s310 = scalar_lea.vmem [#allocation10], %s309
        %s311 = smul.u32 16, %s25
        %s312 = smul.u32 16, %s25
        %v313 = vld [vmem:[%s273] sm:$0xff]
        %v314 = vld [vmem:[%s273 + $0x8] sm:$0xff]
        %v315 = vld [vmem:[%s273 + $0x10] sm:$0xff]
        %v316 = vld [vmem:[%s273 + $0x18] sm:$0xff]
        %v317 = vld [vmem:[%s273 + $0x20] sm:$0xff]
        %v318 = vld [vmem:[%s273 + $0x28] sm:$0xff]
        %v319 = vld [vmem:[%s273 + $0x30] sm:$0xff]
        %v320 = vld [vmem:[%s273 + $0x38] sm:$0xff]
        %v321 = vld [vmem:[%s273 + $0x40] sm:$0xff]
        %v322 = vld [vmem:[%s273 + $0x48] sm:$0xff]
        %v323 = vld [vmem:[%s273 + $0x50] sm:$0xff]
        %v324 = vld [vmem:[%s273 + $0x58] sm:$0xff]
        %v325 = vld [vmem:[%s273 + $0x60] sm:$0xff]
        %v326 = vld [vmem:[%s273 + $0x68] sm:$0xff]
        %v327 = vld [vmem:[%s273 + $0x70] sm:$0xff]
        %v328 = vld [vmem:[%s273 + $0x78] sm:$0xff]
        %v329 = vld [vmem:[#allocation7] sm:$0xff]
        %v330 = vld [vmem:[#allocation7 + $0x8] sm:$0xff]
        %v331 = vld [vmem:[#allocation7 + $0x10] sm:$0xff]
        %v332 = vld [vmem:[#allocation7 + $0x18] sm:$0xff]
        %v333 = vld [vmem:[#allocation7 + $0x20] sm:$0xff]
        %v334 = vld [vmem:[#allocation7 + $0x28] sm:$0xff]
        %v335 = vld [vmem:[#allocation7 + $0x30] sm:$0xff]
        %v336 = vld [vmem:[#allocation7 + $0x38] sm:$0xff]
        %v337 = vld [vmem:[#allocation7 + $0x40] sm:$0xff]
        %v338 = vld [vmem:[#allocation7 + $0x48] sm:$0xff]
        %v339 = vld [vmem:[#allocation7 + $0x50] sm:$0xff]
        %v340 = vld [vmem:[#allocation7 + $0x58] sm:$0xff]
        %v341 = vld [vmem:[#allocation7 + $0x60] sm:$0xff]
        %v342 = vld [vmem:[#allocation7 + $0x68] sm:$0xff]
        %v343 = vld [vmem:[#allocation7 + $0x70] sm:$0xff]
        %v344 = vld [vmem:[#allocation7 + $0x78] sm:$0xff]
        %v345 = vld [vmem:[%s3] sm:$0x1]
        %v347 = vlaneseq
        %v348 = vshrl.u32 %v347, 7
        %v349 = vsub.s32 0, %v348
        %v350 = vrot.slane %v345, %v349
        %352 = vmatprep.subr.mxu0 0.0
        %353 = vmatpush1.msra.mxu0 %v329
        %354 = vmatprep.subr.mxu0 0.0
        %355 = vmatpush1.msra.mxu0 %v330
        %356 = vmatprep.subr.mxu0 0.0
        %357 = vmatpush1.msra.mxu0 %v331
        %358 = vmatprep.subr.mxu0 0.0
        %359 = vmatpush1.msra.mxu0 %v332
        %360 = vmatprep.subr.mxu0 0.0
        %361 = vmatpush1.msra.mxu0 %v333
        %362 = vmatprep.subr.mxu0 0.0
        %363 = vmatpush1.msra.mxu0 %v334
        %364 = vmatprep.subr.mxu0 0.0
        %365 = vmatpush1.msra.mxu0 %v335
        %366 = vmatprep.subr.mxu0 0.0
        %367 = vmatpush1.msra.mxu0 %v336
        %368 = vmatprep.subr.mxu0 0.0
        %369 = vmatpush1.msra.mxu0 %v337
        %370 = vmatprep.subr.mxu0 0.0
        %371 = vmatpush1.msra.mxu0 %v338
        %372 = vmatprep.subr.mxu0 0.0
        %373 = vmatpush1.msra.mxu0 %v339
        %374 = vmatprep.subr.mxu0 0.0
        %375 = vmatpush1.msra.mxu0 %v340
        %376 = vmatprep.subr.mxu0 0.0
        %377 = vmatpush1.msra.mxu0 %v341
        %378 = vmatprep.subr.mxu0 0.0
        %379 = vmatpush1.msra.mxu0 %v342
        %380 = vmatprep.subr.mxu0 0.0
        %381 = vmatpush1.msra.mxu0 %v343
        %382 = vmatprep.subr.mxu0 0.0
        %383 = vmatpush1.msra.mxu0 %v344
        %384 = vmatprep.subr.mxu0 0.0
        %385 = vmatpush1.msra.mxu0 0.0
        %386 = vmatprep.subr.mxu0 0.0
        %387 = vmatpush1.msra.mxu0 0.0
        %388 = vmatprep.subr.mxu0 0.0
        %389 = vmatpush1.msra.mxu0 0.0
        %390 = vmatprep.subr.mxu0 0.0
        %391 = vmatpush1.msra.mxu0 0.0
        %392 = vmatprep.subr.mxu0 0.0
        %393 = vmatpush1.msra.mxu0 0.0
        %394 = vmatprep.subr.mxu0 0.0
        %395 = vmatpush1.msra.mxu0 0.0
        %396 = vmatprep.subr.mxu0 0.0
        %397 = vmatpush1.msra.mxu0 0.0
        %398 = vmatprep.subr.mxu0 0.0
        %399 = vmatpush1.msra.mxu0 0.0
        %400 = vmatprep.subr.mxu0 0.0
        %401 = vmatpush1.msra.mxu0 0.0
        %402 = vmatprep.subr.mxu0 0.0
        %403 = vmatpush1.msra.mxu0 0.0
        %404 = vmatprep.subr.mxu0 0.0
        %405 = vmatpush1.msra.mxu0 0.0
        %406 = vmatprep.subr.mxu0 0.0
        %407 = vmatpush1.msra.mxu0 0.0
        %408 = vmatprep.subr.mxu0 0.0
        %409 = vmatpush1.msra.mxu0 0.0
        %410 = vmatprep.subr.mxu0 0.0
        %411 = vmatpush1.msra.mxu0 0.0
        %412 = vmatprep.subr.mxu0 0.0
        %413 = vmatpush1.msra.mxu0 0.0
        %414 = vmatprep.subr.mxu0 0.0
        %415 = vmatpush1.msra.mxu0 0.0
        %416 = vmatprep.mubr.f32.mxu0 0.0
        %417 = vmatmul.mubr.f32.gmra.mrb[0].mxu0 %v313
        %v418 = vpop.f32.mrb[0].mxu0
        %v419 = vadd.f32 %v350, %v418
        %v420 = vpop.f32.mrb[0].mxu0
        %421 = vmatprep.mubr.f32.mxu0 0.0
        %422 = vmatmul.mubr.f32.gmra.mrb[0].mxu0 %v314
        %v423 = vpop.f32.mrb[0].mxu0
        %v424 = vadd.f32 %v350, %v423
        %v425 = vpop.f32.mrb[0].mxu0
        %426 = vmatprep.mubr.f32.mxu0 0.0
        %427 = vmatmul.mubr.f32.gmra.mrb[0].mxu0 %v315
        %v428 = vpop.f32.mrb[0].mxu0
        %v429 = vadd.f32 %v350, %v428
        %v430 = vpop.f32.mrb[0].mxu0
        %431 = vmatprep.mubr.f32.mxu0 0.0
        %432 = vmatmul.mubr.f32.gmra.mrb[0].mxu0 %v316
        %v433 = vpop.f32.mrb[0].mxu0
        %v434 = vadd.f32 %v350, %v433
        %v435 = vpop.f32.mrb[0].mxu0
        %436 = vmatprep.mubr.f32.mxu0 0.0
        %437 = vmatmul.mubr.f32.gmra.mrb[0].mxu0 %v317
        %v438 = vpop.f32.mrb[0].mxu0
        %v439 = vadd.f32 %v350, %v438
        %v440 = vpop.f32.mrb[0].mxu0
        %441 = vmatprep.mubr.f32.mxu0 0.0
        %442 = vmatmul.mubr.f32.gmra.mrb[0].mxu0 %v318
        %v443 = vpop.f32.mrb[0].mxu0
        %v444 = vadd.f32 %v350, %v443
        %v445 = vpop.f32.mrb[0].mxu0
        %446 = vmatprep.mubr.f32.mxu0 0.0
        %447 = vmatmul.mubr.f32.gmra.mrb[0].mxu0 %v319
        %v448 = vpop.f32.mrb[0].mxu0
        %v449 = vadd.f32 %v350, %v448
        %v450 = vpop.f32.mrb[0].mxu0
        %451 = vmatprep.mubr.f32.mxu0 0.0
        %452 = vmatmul.mubr.f32.gmra.mrb[0].mxu0 %v320
        %v453 = vpop.f32.mrb[0].mxu0
        %v454 = vadd.f32 %v350, %v453
        %v455 = vpop.f32.mrb[0].mxu0
        %456 = vmatprep.mubr.f32.mxu0 0.0
        %457 = vmatmul.mubr.f32.gmra.mrb[0].mxu0 %v321
        %v458 = vpop.f32.mrb[0].mxu0
        %v459 = vadd.f32 %v350, %v458
        %v460 = vpop.f32.mrb[0].mxu0
        %461 = vmatprep.mubr.f32.mxu0 0.0
        %462 = vmatmul.mubr.f32.gmra.mrb[0].mxu0 %v322
        %v463 = vpop.f32.mrb[0].mxu0
        %v464 = vadd.f32 %v350, %v463
        %v465 = vpop.f32.mrb[0].mxu0
        %466 = vmatprep.mubr.f32.mxu0 0.0
        %467 = vmatmul.mubr.f32.gmra.mrb[0].mxu0 %v323
        %v468 = vpop.f32.mrb[0].mxu0
        %v469 = vadd.f32 %v350, %v468
        %v470 = vpop.f32.mrb[0].mxu0
        %471 = vmatprep.mubr.f32.mxu0 0.0
        %472 = vmatmul.mubr.f32.gmra.mrb[0].mxu0 %v324
        %v473 = vpop.f32.mrb[0].mxu0
        %v474 = vadd.f32 %v350, %v473
        %v475 = vpop.f32.mrb[0].mxu0
        %476 = vmatprep.mubr.f32.mxu0 0.0
        %477 = vmatmul.mubr.f32.gmra.mrb[0].mxu0 %v325
        %v478 = vpop.f32.mrb[0].mxu0
        %v479 = vadd.f32 %v350, %v478
        %v480 = vpop.f32.mrb[0].mxu0
        %481 = vmatprep.mubr.f32.mxu0 0.0
        %482 = vmatmul.mubr.f32.gmra.mrb[0].mxu0 %v326
        %v483 = vpop.f32.mrb[0].mxu0
        %v484 = vadd.f32 %v350, %v483
        %v485 = vpop.f32.mrb[0].mxu0
        %486 = vmatprep.mubr.f32.mxu0 0.0
        %487 = vmatmul.mubr.f32.gmra.mrb[0].mxu0 %v327
        %v488 = vpop.f32.mrb[0].mxu0
        %v489 = vadd.f32 %v350, %v488
        %v490 = vpop.f32.mrb[0].mxu0
        %491 = vmatprep.mubr.f32.mxu0 0.0
        %492 = vmatmul.mubr.f32.gmra.mrb[0].mxu0 %v328
        %v493 = vpop.f32.mrb[0].mxu0
        %v494 = vadd.f32 %v350, %v493
        %v495 = vpop.f32.mrb[0].mxu0
        %496 = vdwg.mxu0
        %v497 = vmax.f32 %v419, 0.0
        %v498 = vmax.f32 %v424, 0.0
        %v499 = vmax.f32 %v429, 0.0
        %v500 = vmax.f32 %v434, 0.0
        %v501 = vmax.f32 %v439, 0.0
        %v502 = vmax.f32 %v444, 0.0
        %v503 = vmax.f32 %v449, 0.0
        %v504 = vmax.f32 %v454, 0.0
        %v505 = vmax.f32 %v459, 0.0
        %v506 = vmax.f32 %v464, 0.0
        %v507 = vmax.f32 %v469, 0.0
        %v508 = vmax.f32 %v474, 0.0
        %v509 = vmax.f32 %v479, 0.0
        %v510 = vmax.f32 %v484, 0.0
        %v511 = vmax.f32 %v489, 0.0
        %v512 = vmax.f32 %v494, 0.0
        %s513 = sld [smem:[#allocation2]]
        %s514 = ssub.f32 1.0, %s513
        %v515 = vstv %s514
        %v516 = vmul.f32 %v515, %v497
        %v517 = vmul.f32 %v515, %v498
        %v518 = vmul.f32 %v515, %v499
        %v519 = vmul.f32 %v515, %v500
        %v520 = vmul.f32 %v515, %v501
        %v521 = vmul.f32 %v515, %v502
        %v522 = vmul.f32 %v515, %v503
        %v523 = vmul.f32 %v515, %v504
        %v524 = vmul.f32 %v515, %v505
        %v525 = vmul.f32 %v515, %v506
        %v526 = vmul.f32 %v515, %v507
        %v527 = vmul.f32 %v515, %v508
        %v528 = vmul.f32 %v515, %v509
        %v529 = vmul.f32 %v515, %v510
        %v530 = vmul.f32 %v515, %v511
        %v531 = vmul.f32 %v515, %v512
        %v532 = vld [vmem:[#allocation9] sm:$0xff]
        %v533 = vld [vmem:[#allocation9 + $0x8] sm:$0xff]
        %v534 = vld [vmem:[#allocation9 + $0x10] sm:$0xff]
        %v535 = vld [vmem:[#allocation9 + $0x18] sm:$0xff]
        %v536 = vld [vmem:[#allocation9 + $0x20] sm:$0xff]
        %v537 = vld [vmem:[#allocation9 + $0x28] sm:$0xff]
        %v538 = vld [vmem:[#allocation9 + $0x30] sm:$0xff]
        %v539 = vld [vmem:[#allocation9 + $0x38] sm:$0xff]
        %v540 = vld [vmem:[#allocation9 + $0x40] sm:$0xff]
        %v541 = vld [vmem:[#allocation9 + $0x48] sm:$0xff]
        %v542 = vld [vmem:[#allocation9 + $0x50] sm:$0xff]
        %v543 = vld [vmem:[#allocation9 + $0x58] sm:$0xff]
        %v544 = vld [vmem:[#allocation9 + $0x60] sm:$0xff]
        %v545 = vld [vmem:[#allocation9 + $0x68] sm:$0xff]
        %v546 = vld [vmem:[#allocation9 + $0x70] sm:$0xff]
        %v547 = vld [vmem:[#allocation9 + $0x78] sm:$0xff]
        %v548 = vld [vmem:[%s5] sm:$0x1]
        %v550 = vlaneseq
        %v551 = vshrl.u32 %v550, 7
        %v552 = vsub.s32 0, %v551
        %v553 = vrot.slane %v548, %v552
        %555 = vmatprep.subr.mxu0 0.0
        %556 = vmatpush1.msra.mxu0 %v532
        %557 = vmatprep.subr.mxu0 0.0
        %558 = vmatpush1.msra.mxu0 %v533
        %559 = vmatprep.subr.mxu0 0.0
        %560 = vmatpush1.msra.mxu0 %v534
        %561 = vmatprep.subr.mxu0 0.0
        %562 = vmatpush1.msra.mxu0 %v535
        %563 = vmatprep.subr.mxu0 0.0
        %564 = vmatpush1.msra.mxu0 %v536
        %565 = vmatprep.subr.mxu0 0.0
        %566 = vmatpush1.msra.mxu0 %v537
        %567 = vmatprep.subr.mxu0 0.0
        %568 = vmatpush1.msra.mxu0 %v538
        %569 = vmatprep.subr.mxu0 0.0
        %570 = vmatpush1.msra.mxu0 %v539
        %571 = vmatprep.subr.mxu0 0.0
        %572 = vmatpush1.msra.mxu0 %v540
        %573 = vmatprep.subr.mxu0 0.0
        %574 = vmatpush1.msra.mxu0 %v541
        %575 = vmatprep.subr.mxu0 0.0
        %576 = vmatpush1.msra.mxu0 %v542
        %577 = vmatprep.subr.mxu0 0.0
        %578 = vmatpush1.msra.mxu0 %v543
        %579 = vmatprep.subr.mxu0 0.0
        %580 = vmatpush1.msra.mxu0 %v544
        %581 = vmatprep.subr.mxu0 0.0
        %582 = vmatpush1.msra.mxu0 %v545
        %583 = vmatprep.subr.mxu0 0.0
        %584 = vmatpush1.msra.mxu0 %v546
        %585 = vmatprep.subr.mxu0 0.0
        %586 = vmatpush1.msra.mxu0 %v547
        %587 = vmatprep.subr.mxu0 0.0
        %588 = vmatpush1.msra.mxu0 0.0
        %589 = vmatprep.subr.mxu0 0.0
        %590 = vmatpush1.msra.mxu0 0.0
        %591 = vmatprep.subr.mxu0 0.0
        %592 = vmatpush1.msra.mxu0 0.0
        %593 = vmatprep.subr.mxu0 0.0
        %594 = vmatpush1.msra.mxu0 0.0
        %595 = vmatprep.subr.mxu0 0.0
        %596 = vmatpush1.msra.mxu0 0.0
        %597 = vmatprep.subr.mxu0 0.0
        %598 = vmatpush1.msra.mxu0 0.0
        %599 = vmatprep.subr.mxu0 0.0
        %600 = vmatpush1.msra.mxu0 0.0
        %601 = vmatprep.subr.mxu0 0.0
        %602 = vmatpush1.msra.mxu0 0.0
        %603 = vmatprep.subr.mxu0 0.0
        %604 = vmatpush1.msra.mxu0 0.0
        %605 = vmatprep.subr.mxu0 0.0
        %606 = vmatpush1.msra.mxu0 0.0
        %607 = vmatprep.subr.mxu0 0.0
        %608 = vmatpush1.msra.mxu0 0.0
        %609 = vmatprep.subr.mxu0 0.0
        %610 = vmatpush1.msra.mxu0 0.0
        %611 = vmatprep.subr.mxu0 0.0
        %612 = vmatpush1.msra.mxu0 0.0
        %613 = vmatprep.subr.mxu0 0.0
        %614 = vmatpush1.msra.mxu0 0.0
        %615 = vmatprep.subr.mxu0 0.0
        %616 = vmatpush1.msra.mxu0 0.0
        %617 = vmatprep.subr.mxu0 0.0
        %618 = vmatpush1.msra.mxu0 0.0
        %619 = vmatprep.mubr.f32.mxu0 0.0
        %620 = vmatmul.mubr.f32.gmra.mrb[0].mxu0 %v516
        %v621 = vpop.f32.mrb[0].mxu0
        %v622 = vadd.f32 %v553, %v621
        %v623 = vpop.f32.mrb[0].mxu0
        %624 = vmatprep.mubr.f32.mxu0 0.0
        %625 = vmatmul.mubr.f32.gmra.mrb[0].mxu0 %v517
        %v626 = vpop.f32.mrb[0].mxu0
        %v627 = vadd.f32 %v553, %v626
        %v628 = vpop.f32.mrb[0].mxu0
        %629 = vmatprep.mubr.f32.mxu0 0.0
        %630 = vmatmul.mubr.f32.gmra.mrb[0].mxu0 %v518
        %v631 = vpop.f32.mrb[0].mxu0
        %v632 = vadd.f32 %v553, %v631
        %v633 = vpop.f32.mrb[0].mxu0
        %634 = vmatprep.mubr.f32.mxu0 0.0
        %635 = vmatmul.mubr.f32.gmra.mrb[0].mxu0 %v519
        %v636 = vpop.f32.mrb[0].mxu0
        %v637 = vadd.f32 %v553, %v636
        %v638 = vpop.f32.mrb[0].mxu0
        %639 = vmatprep.mubr.f32.mxu0 0.0
        %640 = vmatmul.mubr.f32.gmra.mrb[0].mxu0 %v520
        %v641 = vpop.f32.mrb[0].mxu0
        %v642 = vadd.f32 %v553, %v641
        %v643 = vpop.f32.mrb[0].mxu0
        %644 = vmatprep.mubr.f32.mxu0 0.0
        %645 = vmatmul.mubr.f32.gmra.mrb[0].mxu0 %v521
        %v646 = vpop.f32.mrb[0].mxu0
        %v647 = vadd.f32 %v553, %v646
        %v648 = vpop.f32.mrb[0].mxu0
        %649 = vmatprep.mubr.f32.mxu0 0.0
        %650 = vmatmul.mubr.f32.gmra.mrb[0].mxu0 %v522
        %v651 = vpop.f32.mrb[0].mxu0
        %v652 = vadd.f32 %v553, %v651
        %v653 = vpop.f32.mrb[0].mxu0
        %654 = vmatprep.mubr.f32.mxu0 0.0
        %655 = vmatmul.mubr.f32.gmra.mrb[0].mxu0 %v523
        %v656 = vpop.f32.mrb[0].mxu0
        %v657 = vadd.f32 %v553, %v656
        %v658 = vpop.f32.mrb[0].mxu0
        %659 = vmatprep.mubr.f32.mxu0 0.0
        %660 = vmatmul.mubr.f32.gmra.mrb[0].mxu0 %v524
        %v661 = vpop.f32.mrb[0].mxu0
        %v662 = vadd.f32 %v553, %v661
        %v663 = vpop.f32.mrb[0].mxu0
        %664 = vmatprep.mubr.f32.mxu0 0.0
        %665 = vmatmul.mubr.f32.gmra.mrb[0].mxu0 %v525
        %v666 = vpop.f32.mrb[0].mxu0
        %v667 = vadd.f32 %v553, %v666
        %v668 = vpop.f32.mrb[0].mxu0
        %669 = vmatprep.mubr.f32.mxu0 0.0
        %670 = vmatmul.mubr.f32.gmra.mrb[0].mxu0 %v526
        %v671 = vpop.f32.mrb[0].mxu0
        %v672 = vadd.f32 %v553, %v671
        %v673 = vpop.f32.mrb[0].mxu0
        %674 = vmatprep.mubr.f32.mxu0 0.0
        %675 = vmatmul.mubr.f32.gmra.mrb[0].mxu0 %v527
        %v676 = vpop.f32.mrb[0].mxu0
        %v677 = vadd.f32 %v553, %v676
        %v678 = vpop.f32.mrb[0].mxu0
        %679 = vmatprep.mubr.f32.mxu0 0.0
        %680 = vmatmul.mubr.f32.gmra.mrb[0].mxu0 %v528
        %v681 = vpop.f32.mrb[0].mxu0
        %v682 = vadd.f32 %v553, %v681
        %v683 = vpop.f32.mrb[0].mxu0
        %684 = vmatprep.mubr.f32.mxu0 0.0
        %685 = vmatmul.mubr.f32.gmra.mrb[0].mxu0 %v529
        %v686 = vpop.f32.mrb[0].mxu0
        %v687 = vadd.f32 %v553, %v686
        %v688 = vpop.f32.mrb[0].mxu0
        %689 = vmatprep.mubr.f32.mxu0 0.0
        %690 = vmatmul.mubr.f32.gmra.mrb[0].mxu0 %v530
        %v691 = vpop.f32.mrb[0].mxu0
        %v692 = vadd.f32 %v553, %v691
        %v693 = vpop.f32.mrb[0].mxu0
        %694 = vmatprep.mubr.f32.mxu0 0.0
        %695 = vmatmul.mubr.f32.gmra.mrb[0].mxu0 %v531
        %v696 = vpop.f32.mrb[0].mxu0
        %v697 = vadd.f32 %v553, %v696
        %v698 = vpop.f32.mrb[0].mxu0
        %699 = vdwg.mxu0
        %s700 = sld [smem:[#allocation2 + $0x1]]
        %s701 = ssub.f32 1.0, %s700
        %v702 = vstv %s701
        %v703 = vmul.f32 %v702, %v622
        %v704 = vmul.f32 %v702, %v627
        %v705 = vmul.f32 %v702, %v632
        %v706 = vmul.f32 %v702, %v637
        %v707 = vmul.f32 %v702, %v642
        %v708 = vmul.f32 %v702, %v647
        %v709 = vmul.f32 %v702, %v652
        %v710 = vmul.f32 %v702, %v657
        %v711 = vmul.f32 %v702, %v662
        %v712 = vmul.f32 %v702, %v667
        %v713 = vmul.f32 %v702, %v672
        %v714 = vmul.f32 %v702, %v677
        %v715 = vmul.f32 %v702, %v682
        %v716 = vmul.f32 %v702, %v687
        %v717 = vmul.f32 %v702, %v692
        %v718 = vmul.f32 %v702, %v697
        %719 = vst [vmem:[%s310] sm:$0xff] %v703
        %720 = vst [vmem:[%s310 + $0x8] sm:$0xff] %v704
        %721 = vst [vmem:[%s310 + $0x10] sm:$0xff] %v705
        %722 = vst [vmem:[%s310 + $0x18] sm:$0xff] %v706
        %723 = vst [vmem:[%s310 + $0x20] sm:$0xff] %v707
        %724 = vst [vmem:[%s310 + $0x28] sm:$0xff] %v708
        %725 = vst [vmem:[%s310 + $0x30] sm:$0xff] %v709
        %726 = vst [vmem:[%s310 + $0x38] sm:$0xff] %v710
        %727 = vst [vmem:[%s310 + $0x40] sm:$0xff] %v711
        %728 = vst [vmem:[%s310 + $0x48] sm:$0xff] %v712
        %729 = vst [vmem:[%s310 + $0x50] sm:$0xff] %v713
        %730 = vst [vmem:[%s310 + $0x58] sm:$0xff] %v714
        %731 = vst [vmem:[%s310 + $0x60] sm:$0xff] %v715
        %732 = vst [vmem:[%s310 + $0x68] sm:$0xff] %v716
        %733 = vst [vmem:[%s310 + $0x70] sm:$0xff] %v717
        %734 = vst [vmem:[%s310 + $0x78] sm:$0xff] %v718
        %s735 = sand.u32 %s164, 1
        %s736 = scalar_lea.sflag [#allocation4], %s735
        %s737 = sand.u32 %s164, 1
        %s738 = smul.addr %s737, 128
        %s739 = scalar_lea.vmem [#allocation10], %s738
        // Predicated region
        $region61: #{tpu_custom_call.1} parent=43 // pred_check
          %p740 = pneg %p174
        $region62: #{tpu_custom_call.1} parent=43 // pred_check_branch
          %742 = sbr.rel (%p740) target = $region64
        $region63: #{tpu_custom_call.1} parent=43 // pred_region
          %s743 = smul.u32 16, %s25
          %s745 = ssub.s32 2048, 2048
          %746 = vsyncadd %s736, %s745
          %s747 = smul.addr %s743, 128
          %s748 = scalar_lea.hbm %s6, %s747
          %s749 = sshll.u32 %s739, 4
          %s750 = int_to_ptr.vmem [resolvable:$true] %s749
          %755 = dma.vmem_to_hbm [thread:$0]  %s750, 2048, %s748, %s736, 128, 128, 8
        $region64: #{tpu_custom_call.1} parent=43 // pred_fallthru
          _
      $region44: #{tpu_custom_call.1} parent=5 // pred_fallthru
        _
      %p756 = scmp.le.s32.totalorder 2, %s20
      // Predicated region
      $region65: #{tpu_custom_call.1} parent=5 // pred_check
        %p757 = pneg %p756
      $region66: #{tpu_custom_call.1} parent=5 // pred_check_branch
        %759 = sbr.rel (%p757) target = $region68
      $region67: #{tpu_custom_call.1} parent=5 // pred_region
        %s760 = ssub.s32 %s20, 2
        // Predicated region
        $region69: #{tpu_custom_call.1} parent=67 // pred_check
          %p761 = pneg %p180
        $region70: #{tpu_custom_call.1} parent=67 // pred_check_branch
          %763 = sbr.rel (%p761) target = $region72
        $region71: #{tpu_custom_call.1} parent=67 // pred_region
          %s764 = sand.u32 %s165, 1
          %s765 = scalar_lea.sflag [#allocation4], %s764
          %s766 = sand.u32 %s165, 1
          %s767 = smul.addr %s766, 128
          %s768 = scalar_lea.vmem [#allocation10], %s767
          %769 = dma.done %s765, 2048
        $region72: #{tpu_custom_call.1} parent=67 // pred_fallthru
          _
      $region68: #{tpu_custom_call.1} parent=5 // pred_fallthru
        _
    $region6: #{tpu_custom_call.1} parent=1 // loop_footer
      %s24 = sadd.s32 1, %s20
    $region7: #{tpu_custom_call.1} parent=1 // loop_footer_branch
      %19 = sbr.rel target = $region3
    $region8: #{tpu_custom_call.1} parent=1 // loop_exit
      _
    %770 = vsyncpa [#allocation3], 1
    %s771 = scalar_lea.sflag [#allocation3], 1
    %772 = vsyncpa %s771, 1
    %773 = vsyncpa [#allocation8], 1
    %774 = vsyncpa [#allocation4], 1
    %s775 = scalar_lea.sflag [#allocation4], 1
    %776 = vsyncpa %s775, 1
    %777 = vsyncpa [#allocation5], 1
    %s778 = scalar_lea.sflag [#allocation5], 1
    %779 = vsyncpa %s778, 1

</llo_original>
